<compile_context>
chip_gen: v7x
topology: tpu7x:2x2x1
jax: 0.10.0
libtpu: 0.0.40
codegen_flags: <defaults>
</compile_context>

<pallas_src>
import jax
import jax.numpy as jnp
from jax.experimental import pallas as pl
from jax.experimental.pallas import tpu as pltpu


def _round_up(x, m):
    return (x + m - 1) // m * m


def _mlp_trunk(x_ref, w1_ref, b1_ref, w2_ref, b2_ref):
    """First two Linear+ReLU layers; bf16 MXU operands, f32 accumulation."""
    x = x_ref[...].astype(jnp.bfloat16)                       # in-kernel cast (VPU, hidden)
    h1 = jnp.dot(x, w1_ref[...], preferred_element_type=jnp.float32)
    h1 = jnp.maximum(h1 + b1_ref[...], 0.0)                   # f32 bias + ReLU (VPU)
    h2 = jnp.dot(h1.astype(jnp.bfloat16), w2_ref[...],
                 preferred_element_type=jnp.float32)
    h2 = jnp.maximum(h2 + b2_ref[...], 0.0)                   # (TB, 128) f32
    return h2


def _critic_kernel_dense(x_ref, w1_ref, b1_ref, w2_ref, b2_ref, w3_ref, b3_ref, o_ref):
    """Lane-dense head: o_ref block is (1, TB//128, 128); requires TB % 128 == 0."""
    h2 = _mlp_trunk(x_ref, w1_ref, b1_ref, w2_ref, b2_ref)
    h2w = h2 * w3_ref[...]                                     # (TB, 128) f32, VPU
    b3 = b3_ref[0]                                             # scalar from SMEM
    nblk = o_ref.shape[1]                                      # static
    for c in range(nblk):                                      # static unroll (<= 16)
        blk = h2w[c * 128:(c + 1) * 128, :]                    # (128, 128) static slice
        # Native 128x128 XLU transpose puts the batch rows on the lane axis; the
        # sublane reduction then yields a lane-dense (128,) row per chunk.
        o_ref[0, c, :] = jnp.sum(blk.T, axis=0) + b3


def _critic_kernel_small(x_ref, w1_ref, b1_ref, w2_ref, b2_ref, w3_ref, b3_ref, o_ref):
    """Fallback head for small/ragged tiles: o_ref block is (TB, 1)."""
    h2 = _mlp_trunk(x_ref, w1_ref, b1_ref, w2_ref, b2_ref)
    v = jnp.sum(h2 * w3_ref[...], axis=-1, keepdims=True)     # (TB, 1) f32
    o_ref[...] = v + b3_ref[0]


def _select_tile(B, tb, S):
    """Pick the batch tile TB and whether the lane-dense output path is usable."""
    # Crude per-batch-row VMEM footprint (bytes): f32 state tile (x2, double buffered)
    # + f32 h1 + bf16 h1 + f32 h2 + f32 h2*w3 + output.  Cap so activations stay well
    # under the 16 MiB default scoped VMEM on v5e (32 MiB on v6e/v7x).
    row_bytes = 8 * S + 4 * 256 + 2 * 256 + 8 * 128 + 16
    tb_cap = max(8, min(tb, (8 << 20) // row_bytes))
    half = pl.cdiv(B, 2)        # aim for >= 2 grid steps so both v7x TCs get work
    if B >= 256 and tb_cap >= 128:
        TB = min((tb_cap // 128) * 128, _round_up(half, 128))
        dense = True
    else:
        TB = max(8, min(_round_up(tb_cap, 8), _round_up(half, 8), _round_up(B, 8)))
        dense = False
    return TB, dense


def continuous_critic_forward(state, params, *, tb=2048):
    """state: (B, state_dim) f32.  Returns value: (B, 1) f32."""
    w1, b1, w2, b2, w3, b3 = params
    B, S = state.shape

    # Weights are tiny: wrapper-side bf16 cast is negligible HBM traffic.  `state`
    # stays f32 all the way into the kernel (cast happens in VMEM, under MXU work).
    w1_bf = w1.astype(jnp.bfloat16)
    w2_bf = w2.astype(jnp.bfloat16)

    TB, dense = _select_tile(B, tb, S)
    G = pl.cdiv(B, TB)          # last block may overhang B; no wrapper-side jnp.pad

    const2d = lambda i: (0, 0)  # weights/biases: same block every step -> VMEM-resident
    in_specs = [
        pl.BlockSpec((TB, S), lambda i: (i, 0)),               # state tile (f32)
        pl.BlockSpec((S, 256), const2d),                       # w1 (resident, bf16)
        pl.BlockSpec((1, 256), const2d),                       # b1 (resident, f32)
        pl.BlockSpec((256, 128), const2d),                     # w2 (resident, bf16)
        pl.BlockSpec((1, 128), const2d),                       # b2 (resident, f32)
        pl.BlockSpec((1, 128), const2d),                       # w3 row (resident, f32)
        pl.BlockSpec(memory_space=pltpu.MemorySpace.SMEM),     # b3 scalar in SMEM
    ]

    # Layer 1 bills a full MXU K-pass even when state_dim << 128/256.
    k1_eff = max(S, 256)
    flops = 2 * B * (k1_eff * 256 + 256 * 128 + 128)
    bytes_accessed = (B * S * 4 + w1_bf.size * 2 + w2_bf.size * 2
                      + (b1.size + b2.size + w3.size + b3.size) * 4 + B * 4)
    compiler_params = pltpu.CompilerParams(
        dimension_semantics=("parallel",))                     # megacore sharding on v7x
    cost = pl.CostEstimate(flops=int(flops), transcendentals=0,
                           bytes_accessed=int(bytes_accessed))

    args = (state, w1_bf, b1, w2_bf, b2, w3, b3)

    if dense:
        nblk = TB // 128
        out = pl.pallas_call(
            _critic_kernel_dense,
            out_shape=jax.ShapeDtypeStruct((G, nblk, 128), jnp.float32),
            grid=(G,),
            in_specs=in_specs,
            out_specs=pl.BlockSpec((1, nblk, 128), lambda i: (i, 0, 0)),
            compiler_params=compiler_params,
            cost_estimate=cost,
        )(*args)
        # Row-major flatten preserves batch order; overhang rows >= B are sliced off.
        return out.reshape(G * TB)[:B].reshape(B, 1)

    out = pl.pallas_call(
        _critic_kernel_small,
        out_shape=jax.ShapeDtypeStruct((B, 1), jnp.float32),
        grid=(G,),
        in_specs=in_specs,
        out_specs=pl.BlockSpec((TB, 1), lambda i: (i, 0)),     # partial last block masked
        compiler_params=compiler_params,
        cost_estimate=cost,
    )(*args)
    return out


def init_params(key, state_dim):
    """Deterministic synthetic init matching nn.Linear shapes.

    w1/w2 are stored transposed ((in, out)) so the kernel computes x @ W + b.
    w3 is kept in PyTorch's native (out=1, in=128) row layout for the VPU
    multiply+reduce head; b3 is a single scalar (shape (1,)).
    """
    ks = jax.random.split(key, 6)

    def uniform(k, shape, fan_in):
        bound = 1.0 / jnp.sqrt(jnp.float32(fan_in))
        return jax.random.uniform(k, shape, jnp.float32, -bound, bound)

    w1 = uniform(ks[0], (state_dim, 256), state_dim)
    b1 = uniform(ks[1], (1, 256), state_dim)
    w2 = uniform(ks[2], (256, 128), 256)
    b2 = uniform(ks[3], (1, 128), 256)
    w3 = uniform(ks[4], (1, 128), 128)
    b3 = uniform(ks[5], (1,), 128)
    return (w1, b1, w2, b2, w3, b3)


def _reference(state, params):
    w1, b1, w2, b2, w3, b3 = params
    h1 = jnp.maximum(state @ w1 + b1, 0.0)
    h2 = jnp.maximum(h1 @ w2 + b2, 0.0)
    return h2 @ w3.T + b3


if __name__ == "__main__":
    key = jax.random.PRNGKey(0)
    k_params, k1, k2, k3 = jax.random.split(key, 4)

    state_dim = 16
    params = init_params(k_params, state_dim)

    # Small batch: single tile, fallback (TB, 1) output path.
    s1 = jax.random.normal(k1, (8, state_dim), dtype=jnp.float32)
    v1 = jax.block_until_ready(continuous_critic_forward(s1, params))
    r1 = _reference(s1, params)
    assert v1.shape == (8, 1)
    assert jnp.allclose(v1, r1, atol=3e-2, rtol=3e-2), "mismatch vs reference (B=8)"

    # Ragged batch: grid of 2 with an overhanging last block (B=20, TB=16).
    s2 = jax.random.normal(k2, (20, state_dim), dtype=jnp.float32)
    v2 = jax.block_until_ready(continuous_critic_forward(s2, params, tb=16))
    r2 = _reference(s2, params)
    assert v2.shape == (20, 1)
    assert jnp.allclose(v2, r2, atol=3e-2, rtol=3e-2), "mismatch vs reference (B=20)"

    # Batch large enough for the lane-dense output path (B=300 -> TB=256, G=2, overhang).
    s3 = jax.random.normal(k3, (300, state_dim), dtype=jnp.float32)
    v3 = jax.block_until_ready(continuous_critic_forward(s3, params))
    r3 = _reference(s3, params)
    assert v3.shape == (300, 1)
    assert jnp.allclose(v3, r3, atol=3e-2, rtol=3e-2), "mismatch vs reference (B=300)"

    print("KERNEL_OK")
</pallas_src>

<mosaic_0001>
module attributes {stable_mosaic.version = 11 : i64} {
  func.func @_critic_kernel_small(%arg0: i32, %arg1: memref<8x16xf32, #tpu.memory_space<vmem>>, %arg2: memref<16x256xbf16, #tpu.memory_space<vmem>>, %arg3: memref<1x256xf32, #tpu.memory_space<vmem>>, %arg4: memref<256x128xbf16, #tpu.memory_space<vmem>>, %arg5: memref<1x128xf32, #tpu.memory_space<vmem>>, %arg6: memref<1x128xf32, #tpu.memory_space<vmem>>, %arg7: memref<1xf32, #tpu.memory_space<smem>>, %arg8: memref<8x1xf32, #tpu.memory_space<vmem>>) attributes {dimension_semantics = [#tpu.dimension_semantics<parallel>], iteration_bounds = array<i64: 1>, scalar_prefetch = 0 : i64, scratch_operands = 0 : i64, tpu.core_type = #tpu.core_type<tc>, window_params = [{transform_indices = @transform_0, window_bounds = array<i64: 8, 16>}, {pipeline_mode = #tpu.pipeline_mode<synchronous>, transform_indices = @transform_1, window_bounds = array<i64: 16, 256>}, {pipeline_mode = #tpu.pipeline_mode<synchronous>, transform_indices = @transform_2, window_bounds = array<i64: 1, 256>}, {pipeline_mode = #tpu.pipeline_mode<synchronous>, transform_indices = @transform_3, window_bounds = array<i64: 256, 128>}, {pipeline_mode = #tpu.pipeline_mode<synchronous>, transform_indices = @transform_4, window_bounds = array<i64: 1, 128>}, {pipeline_mode = #tpu.pipeline_mode<synchronous>, transform_indices = @transform_5, window_bounds = array<i64: 1, 128>}, {transform_indices = @transform_6, window_bounds = array<i64: 1>}, {transform_indices = @transform_7, window_bounds = array<i64: 8, 1>}]} {
    %c0 = arith.constant 0 : index
    %c0_0 = arith.constant 0 : index
    %0 = vector.load %arg1[%c0, %c0_0] : memref<8x16xf32, #tpu.memory_space<vmem>>, vector<8x16xf32>
    %1 = arith.truncf %0 : vector<8x16xf32> to vector<8x16xbf16>
    %c0_1 = arith.constant 0 : index
    %c0_2 = arith.constant 0 : index
    %2 = vector.load %arg2[%c0_1, %c0_2] : memref<16x256xbf16, #tpu.memory_space<vmem>>, vector<16x256xbf16>
    %cst = arith.constant dense<0.000000e+00> : vector<8x256xf32>
    %3 = tpu.matmul %1, %2, %cst {dimension_numbers = #tpu.dot_dimension_numbers<[1], [0], [0], [1], [0, 0, 1, 1], [], []>} : vector<8x16xbf16>, vector<16x256xbf16>, vector<8x256xf32> -> vector<8x256xf32>
    %c0_3 = arith.constant 0 : index
    %c0_4 = arith.constant 0 : index
    %4 = vector.load %arg3[%c0_3, %c0_4] : memref<1x256xf32, #tpu.memory_space<vmem>>, vector<1x256xf32>
    %5 = vector.broadcast %4 : vector<1x256xf32> to vector<8x256xf32>
    %6 = arith.addf %3, %5 : vector<8x256xf32>
    %cst_5 = arith.constant 0.000000e+00 : f32
    %7 = vector.broadcast %cst_5 : f32 to vector<8x256xf32>
    %8 = arith.maximumf %6, %7 : vector<8x256xf32>
    %9 = arith.truncf %8 : vector<8x256xf32> to vector<8x256xbf16>
    %c0_6 = arith.constant 0 : index
    %c0_7 = arith.constant 0 : index
    %10 = vector.load %arg4[%c0_6, %c0_7] : memref<256x128xbf16, #tpu.memory_space<vmem>>, vector<256x128xbf16>
    %cst_8 = arith.constant dense<0.000000e+00> : vector<8x128xf32>
    %11 = tpu.matmul %9, %10, %cst_8 {dimension_numbers = #tpu.dot_dimension_numbers<[1], [0], [0], [1], [0, 0, 1, 1], [], []>} : vector<8x256xbf16>, vector<256x128xbf16>, vector<8x128xf32> -> vector<8x128xf32>
    %c0_9 = arith.constant 0 : index
    %c0_10 = arith.constant 0 : index
    %12 = vector.load %arg5[%c0_9, %c0_10] : memref<1x128xf32, #tpu.memory_space<vmem>>, vector<1x128xf32>
    %13 = vector.broadcast %12 : vector<1x128xf32> to vector<8x128xf32>
    %14 = arith.addf %11, %13 : vector<8x128xf32>
    %cst_11 = arith.constant 0.000000e+00 : f32
    %15 = vector.broadcast %cst_11 : f32 to vector<8x128xf32>
    %16 = arith.maximumf %14, %15 : vector<8x128xf32>
    %c0_12 = arith.constant 0 : index
    %c0_13 = arith.constant 0 : index
    %17 = vector.load %arg6[%c0_12, %c0_13] : memref<1x128xf32, #tpu.memory_space<vmem>>, vector<1x128xf32>
    %18 = vector.broadcast %17 : vector<1x128xf32> to vector<8x128xf32>
    %19 = arith.mulf %16, %18 : vector<8x128xf32>
    %cst_14 = arith.constant dense<0.000000e+00> : vector<8xf32>
    %20 = vector.multi_reduction <add>, %19, %cst_14 [1] : vector<8x128xf32> to vector<8xf32>
    %21 = vector.shape_cast %20 : vector<8xf32> to vector<8x1xf32>
    %c0_15 = arith.constant 0 : index
    %22 = memref.load %arg7[%c0_15] : memref<1xf32, #tpu.memory_space<smem>>
    %23 = vector.broadcast %22 : f32 to vector<8x1xf32>
    %24 = arith.addf %21, %23 : vector<8x1xf32>
    %c0_16 = arith.constant 0 : index
    %c0_17 = arith.constant 0 : index
    %25 = vector.load %arg8[%c0_16, %c0_17] : memref<8x1xf32, #tpu.memory_space<vmem>>, vector<8x1xf32>
    tpu.vector_store %arg8[%c0_16, %c0_17], %24 {strides = array<i32>} : memref<8x1xf32, #tpu.memory_space<vmem>>, vector<8x1xf32>,
    return
  }
  func.func @transform_0(%arg0: i32) -> (i32, i32) {
    %c0_i32 = arith.constant 0 : i32
    %c0_i32_0 = arith.constant 0 : i32
    return %arg0, %c0_i32 : i32, i32
  }
  func.func @transform_1(%arg0: i32) -> (i32, i32) {
    %c0_i32 = arith.constant 0 : i32
    %c0_i32_0 = arith.constant 0 : i32
    %c0_i32_1 = arith.constant 0 : i32
    return %c0_i32, %c0_i32_0 : i32, i32
  }
  func.func @transform_2(%arg0: i32) -> (i32, i32) {
    %c0_i32 = arith.constant 0 : i32
    %c0_i32_0 = arith.constant 0 : i32
    %c0_i32_1 = arith.constant 0 : i32
    return %c0_i32, %c0_i32_0 : i32, i32
  }
  func.func @transform_3(%arg0: i32) -> (i32, i32) {
    %c0_i32 = arith.constant 0 : i32
    %c0_i32_0 = arith.constant 0 : i32
    %c0_i32_1 = arith.constant 0 : i32
    return %c0_i32, %c0_i32_0 : i32, i32
  }
  func.func @transform_4(%arg0: i32) -> (i32, i32) {
    %c0_i32 = arith.constant 0 : i32
    %c0_i32_0 = arith.constant 0 : i32
    %c0_i32_1 = arith.constant 0 : i32
    return %c0_i32, %c0_i32_0 : i32, i32
  }
  func.func @transform_5(%arg0: i32) -> (i32, i32) {
    %c0_i32 = arith.constant 0 : i32
    %c0_i32_0 = arith.constant 0 : i32
    %c0_i32_1 = arith.constant 0 : i32
    return %c0_i32, %c0_i32_0 : i32, i32
  }
  func.func @transform_6(%arg0: i32) -> i32 {
    %c0_i32 = arith.constant 0 : i32
    %c0_i32_0 = arith.constant 0 : i32
    return %c0_i32 : i32
  }
  func.func @transform_7(%arg0: i32) -> (i32, i32) {
    %c0_i32 = arith.constant 0 : i32
    %c0_i32_0 = arith.constant 0 : i32
    return %arg0, %c0_i32 : i32, i32
  }
}

</mosaic_0001>

<llo_original>
// kernel: tpu_custom_call.1
$region0: #{tpu_custom_call.1}
  #allocation0 [shape = 'u32[]', space=smem, size = 0x4, offset = 0x4, fixed_abs, tag = 'smem constant byte address 0x4 - core index']
  #allocation1 [shape = 'u32[144,128]{1,0:T(1,128)}', space=vmem, size = 0x12000, scoped, tag = 'internal scratch']
  #allocation2 [shape = 'f32[1]{0:T(128)S(6)}', space=smem, size = 0x200, scoped, tag = 'scoped memory for tpu_custom_call.1']
  %s0 = inlined_call_operand.hbm [shape: f32[8,16], index: 0, kind: input, shape index: {}]
  %s1 = inlined_call_operand.hbm [shape: bf16[16,256], index: 1, kind: input, shape index: {}]
  %s2 = inlined_call_operand.vmem [shape: f32[1,256], index: 2, kind: input, shape index: {}]
  %s3 = inlined_call_operand.hbm [shape: bf16[256,128], index: 3, kind: input, shape index: {}]
  %s4 = inlined_call_operand.vmem [shape: f32[1,128], index: 4, kind: input, shape index: {}]
  %s5 = inlined_call_operand.vmem [shape: f32[1,128], index: 5, kind: input, shape index: {}]
  %s6 = inlined_call_operand.<no memory space> [shape: f32[1], index: 6, kind: input, shape index: {}]
  %s7 = inlined_call_operand.vmem [shape: f32[8,1], index: 7, kind: output, shape index: {}]
  %s8 = sld [smem:[#allocation0]]
  $region50: #{tpu_custom_call.1} parent=0
    _
  %s10 = ssub.s32 1, %s8
  %s11 = scalar_select 0, %s10, %s8
  %12 = sst [smem:[#allocation2]] %s6
  $region1: #{tpu_custom_call.1} parent=0
    #allocation3 [shape = 'u8[4096]{0}', space=vmem, size = 0x1000, scoped, tag = 'input window, operand 0, single buffered']
    #allocation4 [shape = 's32[1]{0}', space=sflag, size = 0x4, scoped, tag = 'scoped memory for tpu_custom_call.1']
    #allocation5 [shape = 'u8[8192]{0}', space=vmem, size = 0x2000, scoped, tag = 'input window, operand 1, single buffered']
    #allocation6 [shape = 's32[1]{0}', space=sflag, size = 0x4, scoped, tag = 'scoped memory for tpu_custom_call.1']
    #allocation7 [shape = 'u8[65536]{0}', space=vmem, size = 0x10000, scoped, tag = 'input window, operand 3, single buffered']
    %13 = vsyncpa [#allocation4], 0
    %14 = vsyncpa [#allocation6], 0
    // Predicated region
    $region2: #{tpu_custom_call.1} parent=1 // pred_check
      _
    $region3: #{tpu_custom_call.1} parent=1 // pred_check_branch
      %16 = sbr.rel (0) target = $region5
    $region4: #{tpu_custom_call.1} parent=1 // pred_region
      %s18 = ssub.s32 128, 128
      %19 = vsyncadd [#allocation4], %s18
      %s21 = sshll.u32 [#allocation3], 4
      %s22 = int_to_ptr.vmem [resolvable:$true] %s21
      %24 = dma.hbm_to_vmem [thread:$0]  %s0, 128, %s22, [#allocation4]
    $region5: #{tpu_custom_call.1} parent=1 // pred_fallthru
      _
    // Predicated region
    $region6: #{tpu_custom_call.1} parent=1 // pred_check
      _
    $region7: #{tpu_custom_call.1} parent=1 // pred_check_branch
      %26 = sbr.rel (0) target = $region9
    $region8: #{tpu_custom_call.1} parent=1 // pred_region
      %s28 = ssub.s32 256, 256
      %29 = vsyncadd [#allocation6], %s28
      %s30 = sshll.u32 [#allocation5], 4
      %s31 = int_to_ptr.vmem [resolvable:$true] %s30
      %36 = dma.hbm_to_vmem [thread:$0]  %s1, 256, %s31, [#allocation6], 128, 128, 8
    $region9: #{tpu_custom_call.1} parent=1 // pred_fallthru
      _
    // Predicated region
    $region10: #{tpu_custom_call.1} parent=1 // pred_check
      _
    $region11: #{tpu_custom_call.1} parent=1 // pred_check_branch
      %38 = sbr.rel (0) target = $region13
    $region12: #{tpu_custom_call.1} parent=1 // pred_region
      _
    $region13: #{tpu_custom_call.1} parent=1 // pred_fallthru
      _
    // Predicated region
    $region14: #{tpu_custom_call.1} parent=1 // pred_check
      _
    $region15: #{tpu_custom_call.1} parent=1 // pred_check_branch
      %40 = sbr.rel (0) target = $region17
    $region16: #{tpu_custom_call.1} parent=1 // pred_region
      %s42 = ssub.s32 2048, 2048
      %43 = vsyncadd [#allocation6], %s42
      %s44 = sshll.u32 [#allocation7], 4
      %s45 = int_to_ptr.vmem [resolvable:$true] %s44
      %50 = dma.hbm_to_vmem [thread:$0]  %s3, 2048, %s45, [#allocation6], 64, 64, 4
    $region17: #{tpu_custom_call.1} parent=1 // pred_fallthru
      _
    // Predicated region
    $region18: #{tpu_custom_call.1} parent=1 // pred_check
      _
    $region19: #{tpu_custom_call.1} parent=1 // pred_check_branch
      %52 = sbr.rel (0) target = $region21
    $region20: #{tpu_custom_call.1} parent=1 // pred_region
      _
    $region21: #{tpu_custom_call.1} parent=1 // pred_fallthru
      _
    // Predicated region
    $region22: #{tpu_custom_call.1} parent=1 // pred_check
      _
    $region23: #{tpu_custom_call.1} parent=1 // pred_check_branch
      %54 = sbr.rel (0) target = $region25
    $region24: #{tpu_custom_call.1} parent=1 // pred_region
      _
    $region25: #{tpu_custom_call.1} parent=1 // pred_fallthru
      _
    // Predicated region
    $region26: #{tpu_custom_call.1} parent=1 // pred_check
      _
    $region27: #{tpu_custom_call.1} parent=1 // pred_check_branch
      %56 = sbr.rel (0) target = $region29
    $region28: #{tpu_custom_call.1} parent=1 // pred_region
      _
    $region29: #{tpu_custom_call.1} parent=1 // pred_fallthru
      _
    // Predicated region
    $region30: #{tpu_custom_call.1} parent=1 // pred_check
      _
    $region31: #{tpu_custom_call.1} parent=1 // pred_check_branch
      %58 = sbr.rel (0) target = $region33
    $region32: #{tpu_custom_call.1} parent=1 // pred_region
      %59 = dma.done [#allocation4], 128
    $region33: #{tpu_custom_call.1} parent=1 // pred_fallthru
      _
    // Predicated region
    $region34: #{tpu_custom_call.1} parent=1 // pred_check
      _
    $region35: #{tpu_custom_call.1} parent=1 // pred_check_branch
      %61 = sbr.rel (0) target = $region37
    $region36: #{tpu_custom_call.1} parent=1 // pred_region
      %62 = dma.done [#allocation6], 256
    $region37: #{tpu_custom_call.1} parent=1 // pred_fallthru
      _
    // Predicated region
    $region38: #{tpu_custom_call.1} parent=1 // pred_check
      _
    $region39: #{tpu_custom_call.1} parent=1 // pred_check_branch
      %64 = sbr.rel (0) target = $region41
    $region40: #{tpu_custom_call.1} parent=1 // pred_region
      %65 = dma.done [#allocation6], 2048
    $region41: #{tpu_custom_call.1} parent=1 // pred_fallthru
      _
    %v67 = vld [vmem:[#allocation3] sm:$0xff]
    %v68 = vpack.c.bf16 %v67, %v67
    %v69 = vld [vmem:[#allocation5] sm:$0xff]
    %v70 = vld [vmem:[#allocation5 + $0x8] sm:$0xff]
    %v71 = vld [vmem:[%s2] sm:$0x3]
    %v73 = vlaneseq
    %v74 = vshrl.u32 %v73, 7
    %v75 = vsub.s32 0, %v74
    %v76 = vrot.slane %v71, %v75
    %v77 = vlaneseq
    %v78 = vshrl.u32 %v77, 7
    %v79 = vsub.s32 1, %v78
    %v80 = vrot.slane %v71, %v79
    %v85 = vunpack.c.l.b16 %v69
    %v86 = vunpack.c.h.b16 %v69
    %v87 = vunpack.c.l.b16 %v70
    %v88 = vunpack.c.h.b16 %v70
    %v89 = vpack.c.b16 %v87, %v85
    %v90 = vpack.c.b16 %v88, %v86
    %vm93 = vcmask 130048
    %v95 = vsel %vm93, %v68, 0
    %97 = vmatprep.subr.bf16.mxu0 %v90
    %98 = vmatpush1.bf16.msra.mxu0 %v89
    %99 = vmatprep.subr.bf16.mxu0 0
    %100 = vmatpush1.bf16.msra.mxu0 0
    %101 = vmatprep.subr.bf16.mxu0 0
    %102 = vmatpush1.bf16.msra.mxu0 0
    %103 = vmatprep.subr.bf16.mxu0 0
    %104 = vmatpush1.bf16.msra.mxu0 0
    %105 = vmatprep.subr.bf16.mxu0 0
    %106 = vmatpush1.bf16.msra.mxu0 0
    %107 = vmatprep.subr.bf16.mxu0 0
    %108 = vmatpush1.bf16.msra.mxu0 0
    %109 = vmatprep.subr.bf16.mxu0 0
    %110 = vmatpush1.bf16.msra.mxu0 0
    %111 = vmatprep.subr.bf16.mxu0 0
    %112 = vmatpush1.bf16.msra.mxu0 0
    %113 = vmatprep.subr.bf16.mxu0 0
    %114 = vmatpush1.bf16.msra.mxu0 0
    %115 = vmatprep.subr.bf16.mxu0 0
    %116 = vmatpush1.bf16.msra.mxu0 0
    %117 = vmatprep.subr.bf16.mxu0 0
    %118 = vmatpush1.bf16.msra.mxu0 0
    %119 = vmatprep.subr.bf16.mxu0 0
    %120 = vmatpush1.bf16.msra.mxu0 0
    %121 = vmatprep.subr.bf16.mxu0 0
    %122 = vmatpush1.bf16.msra.mxu0 0
    %123 = vmatprep.subr.bf16.mxu0 0
    %124 = vmatpush1.bf16.msra.mxu0 0
    %125 = vmatprep.subr.bf16.mxu0 0
    %126 = vmatpush1.bf16.msra.mxu0 0
    %127 = vmatprep.subr.bf16.mxu0 0
    %128 = vmatpush1.bf16.msra.mxu0 0
    %129 = vmatprep.mubr.bf16.mxu0 0
    %130 = vmatmul.mubr.bf16.gmra.mrb[0].mxu0 %v95
    %v131 = vpop.f32.mrb[0].mxu0
    %v132 = vadd.f32 %v76, %v131
    %v133 = vpop.f32.mrb[0].mxu0
    %v134 = vadd.f32 %v80, %v133
    %v135 = vpop.f32.mrb[0].mxu0
    %v136 = vpop.f32.mrb[0].mxu0
    %137 = vdwg.mxu0
    %v138 = vmax.f32 %v132, 0.0
    %v139 = vmax.f32 %v134, 0.0
    %v140 = vpack.c.bf16 %v138, %v138
    %v141 = vpack.c.bf16 %v139, %v139
    %v142 = vld [vmem:[#allocation7] sm:$0xf]
    %v143 = vld [vmem:[#allocation7 + $0x4] sm:$0xf]
    %v144 = vld [vmem:[#allocation7 + $0x8] sm:$0xf]
    %v145 = vld [vmem:[#allocation7 + $0xc] sm:$0xf]
    %v146 = vld [vmem:[#allocation7 + $0x10] sm:$0xf]
    %v147 = vld [vmem:[#allocation7 + $0x14] sm:$0xf]
    %v148 = vld [vmem:[#allocation7 + $0x18] sm:$0xf]
    %v149 = vld [vmem:[#allocation7 + $0x1c] sm:$0xf]
    %v150 = vld [vmem:[#allocation7 + $0x20] sm:$0xf]
    %v151 = vld [vmem:[#allocation7 + $0x24] sm:$0xf]
    %v152 = vld [vmem:[#allocation7 + $0x28] sm:$0xf]
    %v153 = vld [vmem:[#allocation7 + $0x2c] sm:$0xf]
    %v154 = vld [vmem:[#allocation7 + $0x30] sm:$0xf]
    %v155 = vld [vmem:[#allocation7 + $0x34] sm:$0xf]
    %v156 = vld [vmem:[#allocation7 + $0x38] sm:$0xf]
    %v157 = vld [vmem:[#allocation7 + $0x3c] sm:$0xf]
    %v158 = vld [vmem:[#allocation7 + $0x40] sm:$0xf]
    %v159 = vld [vmem:[#allocation7 + $0x44] sm:$0xf]
    %v160 = vld [vmem:[#allocation7 + $0x48] sm:$0xf]
    %v161 = vld [vmem:[#allocation7 + $0x4c] sm:$0xf]
    %v162 = vld [vmem:[#allocation7 + $0x50] sm:$0xf]
    %v163 = vld [vmem:[#allocation7 + $0x54] sm:$0xf]
    %v164 = vld [vmem:[#allocation7 + $0x58] sm:$0xf]
    %v165 = vld [vmem:[#allocation7 + $0x5c] sm:$0xf]
    %v166 = vld [vmem:[#allocation7 + $0x60] sm:$0xf]
    %v167 = vld [vmem:[#allocation7 + $0x64] sm:$0xf]
    %v168 = vld [vmem:[#allocation7 + $0x68] sm:$0xf]
    %v169 = vld [vmem:[#allocation7 + $0x6c] sm:$0xf]
    %v170 = vld [vmem:[#allocation7 + $0x70] sm:$0xf]
    %v171 = vld [vmem:[#allocation7 + $0x74] sm:$0xf]
    %v172 = vld [vmem:[#allocation7 + $0x78] sm:$0xf]
    %v173 = vld [vmem:[#allocation7 + $0x7c] sm:$0xf]
    %v174 = vld [vmem:[%s4] sm:$0x1]
    %v176 = vlaneseq
    %v177 = vshrl.u32 %v176, 7
    %v178 = vsub.s32 0, %v177
    %v179 = vrot.slane %v174, %v178
    %v213 = vunpack.c.l.b16 %v142
    %v214 = vunpack.c.l.b16 %v143
    %v215 = vunpack.c.l.b16 %v144
    %v216 = vunpack.c.l.b16 %v145
    %v217 = vunpack.c.l.b16 %v146
    %v218 = vunpack.c.l.b16 %v147
    %v219 = vunpack.c.l.b16 %v148
    %v220 = vunpack.c.l.b16 %v149
    %v221 = vunpack.c.l.b16 %v150
    %v222 = vunpack.c.l.b16 %v151
    %v223 = vunpack.c.l.b16 %v152
    %v224 = vunpack.c.l.b16 %v153
    %v225 = vunpack.c.l.b16 %v154
    %v226 = vunpack.c.l.b16 %v155
    %v227 = vunpack.c.l.b16 %v156
    %v228 = vunpack.c.l.b16 %v157
    %v229 = vunpack.c.l.b16 %v158
    %v230 = vunpack.c.l.b16 %v159
    %v231 = vunpack.c.l.b16 %v160
    %v232 = vunpack.c.l.b16 %v161
    %v233 = vunpack.c.l.b16 %v162
    %v234 = vunpack.c.l.b16 %v163
    %v235 = vunpack.c.l.b16 %v164
    %v236 = vunpack.c.l.b16 %v165
    %v237 = vunpack.c.l.b16 %v166
    %v238 = vunpack.c.l.b16 %v167
    %v239 = vunpack.c.l.b16 %v168
    %v240 = vunpack.c.l.b16 %v169
    %v241 = vunpack.c.l.b16 %v170
    %v242 = vunpack.c.l.b16 %v171
    %v243 = vunpack.c.l.b16 %v172
    %v244 = vunpack.c.l.b16 %v173
    %v245 = vpack.c.b16 %v214, %v213
    %v246 = vpack.c.b16 %v216, %v215
    %v247 = vpack.c.b16 %v218, %v217
    %v248 = vpack.c.b16 %v220, %v219
    %v249 = vpack.c.b16 %v222, %v221
    %v250 = vpack.c.b16 %v224, %v223
    %v251 = vpack.c.b16 %v226, %v225
    %v252 = vpack.c.b16 %v228, %v227
    %v253 = vpack.c.b16 %v230, %v229
    %v254 = vpack.c.b16 %v232, %v231
    %v255 = vpack.c.b16 %v234, %v233
    %v256 = vpack.c.b16 %v236, %v235
    %v257 = vpack.c.b16 %v238, %v237
    %v258 = vpack.c.b16 %v240, %v239
    %v259 = vpack.c.b16 %v242, %v241
    %v260 = vpack.c.b16 %v244, %v243
    %277 = vmatprep.subr.bf16.mxu0 0
    %278 = vmatpush1.bf16.msra.mxu0 %v245
    %279 = vmatprep.subr.bf16.mxu0 0
    %280 = vmatpush1.bf16.msra.mxu0 %v246
    %281 = vmatprep.subr.bf16.mxu0 0
    %282 = vmatpush1.bf16.msra.mxu0 %v247
    %283 = vmatprep.subr.bf16.mxu0 0
    %284 = vmatpush1.bf16.msra.mxu0 %v248
    %285 = vmatprep.subr.bf16.mxu0 0
    %286 = vmatpush1.bf16.msra.mxu0 %v249
    %287 = vmatprep.subr.bf16.mxu0 0
    %288 = vmatpush1.bf16.msra.mxu0 %v250
    %289 = vmatprep.subr.bf16.mxu0 0
    %290 = vmatpush1.bf16.msra.mxu0 %v251
    %291 = vmatprep.subr.bf16.mxu0 0
    %292 = vmatpush1.bf16.msra.mxu0 %v252
    %293 = vmatprep.subr.bf16.mxu0 0
    %294 = vmatpush1.bf16.msra.mxu0 %v253
    %295 = vmatprep.subr.bf16.mxu0 0
    %296 = vmatpush1.bf16.msra.mxu0 %v254
    %297 = vmatprep.subr.bf16.mxu0 0
    %298 = vmatpush1.bf16.msra.mxu0 %v255
    %299 = vmatprep.subr.bf16.mxu0 0
    %300 = vmatpush1.bf16.msra.mxu0 %v256
    %301 = vmatprep.subr.bf16.mxu0 0
    %302 = vmatpush1.bf16.msra.mxu0 %v257
    %303 = vmatprep.subr.bf16.mxu0 0
    %304 = vmatpush1.bf16.msra.mxu0 %v258
    %305 = vmatprep.subr.bf16.mxu0 0
    %306 = vmatpush1.bf16.msra.mxu0 %v259
    %307 = vmatprep.subr.bf16.mxu0 0
    %308 = vmatpush1.bf16.msra.mxu0 %v260
    %309 = vmatprep.mubr.bf16.mxu0 %v141
    %310 = vmatmul.mubr.bf16.gmra.mrb[0].mxu0 %v140
    %v311 = vpop.f32.mrb[0].mxu0
    %v312 = vadd.f32 %v179, %v311
    %v313 = vpop.f32.mrb[0].mxu0
    %v314 = vpop.f32.mrb[0].mxu0
    %v315 = vpop.f32.mrb[0].mxu0
    %316 = vdwg.mxu0
    %v317 = vmax.f32 %v312, 0.0
    %v318 = vld [vmem:[%s5] sm:$0x1]
    %v320 = vlaneseq
    %v321 = vshrl.u32 %v320, 7
    %v322 = vsub.s32 0, %v321
    %v323 = vrot.slane %v318, %v322
    %v325 = vmul.f32 %v317, %v323
    %326 = vadd.xlane.f32.xlu0 %v325
    %v327 = vpop.xlane.xlu0 %326
    %s328 = sld [smem:[#allocation2]]
    %v329 = vstv %s328
    %v330 = vadd.f32 %v327, %v329
    %vm331 = vcmask 7168
    %332 = vst.msk [vmem:[%s7] sm:$0xff] %vm331, %v330
    // Predicated region
    $region42: #{tpu_custom_call.1} parent=1 // pred_check
      _
    $region43: #{tpu_custom_call.1} parent=1 // pred_check_branch
      %334 = sbr.rel (0) target = $region45
    $region44: #{tpu_custom_call.1} parent=1 // pred_region
      _
    $region45: #{tpu_custom_call.1} parent=1 // pred_fallthru
      _
    // Predicated region
    $region46: #{tpu_custom_call.1} parent=1 // pred_check
      _
    $region47: #{tpu_custom_call.1} parent=1 // pred_check_branch
      %336 = sbr.rel (0) target = $region49
    $region48: #{tpu_custom_call.1} parent=1 // pred_region
      _
    $region49: #{tpu_custom_call.1} parent=1 // pred_fallthru
      _
    %337 = vsyncpa [#allocation4], 1
    %338 = vsyncpa [#allocation6], 1

</llo_original>
